<compile_context>
chip_gen: v7x
topology: tpu7x:2x2x1
jax: 0.10.0
libtpu: 0.0.40
codegen_flags: <defaults>
</compile_context>

<pallas_src>
import functools

import jax
import jax.numpy as jnp
from jax.experimental import pallas as pl
from jax.experimental.pallas import tpu as pltpu

_LANES = 128  # vreg lane width
_SUB = 8      # vreg sublane count


def _dice_sums_kernel(p_ref, t_ref, o_ref, *, m_rows, tile_m, bps, mask_tail):
    """Accumulate per-lane sums of p*t, p, t into the resident (24,128) output.

    o_ref rows [0:8)   : per-lane sum of pred*truth (sublane-group partials)
    o_ref rows [8:16)  : per-lane sum of pred
    o_ref rows [16:24) : per-lane sum of truth
    """
    i = pl.program_id(1)

    @pl.when(i == 0)
    def _():
        o_ref[...] = jnp.zeros_like(o_ref)

    p = p_ref[...].astype(jnp.float32)
    t = t_ref[...].astype(jnp.float32)

    if mask_tail:
        # Zero rows past the end of the (M, 128) view (ragged last block).
        c = pl.program_id(0)
        row0 = (c * bps + i) * tile_m
        ridx = jax.lax.broadcasted_iota(jnp.int32, (tile_m, _LANES), 0) + row0
        keep = ridx < m_rows
        p = jnp.where(keep, p, 0.0)
        t = jnp.where(keep, t, 0.0)

    if tile_m % _SUB == 0:
        groups = tile_m // _SUB

        def lane_partial(x):
            # (tile_m,128) -> (groups,8,128); sum over leading axis is pure
            # elementwise vreg adds (no cross-sublane XLU work per iteration).
            return jnp.sum(x.reshape(groups, _SUB, _LANES), axis=0)

        band = _SUB
    else:
        # Tiny-input fallback (single short block); performance irrelevant.
        def lane_partial(x):
            return jnp.sum(x, axis=0, keepdims=True)

        band = 1

    o_ref[0:band, :] += lane_partial(p * t)
    o_ref[_SUB:_SUB + band, :] += lane_partial(p)
    o_ref[2 * _SUB:2 * _SUB + band, :] += lane_partial(t)


def _channel_sums(y_pred, y_truth, *, tile_m_max=4096, num_splits=2):
    """Returns (prod_sums, pred_sums, truth_sums), each of shape (C,), float32."""
    assert y_pred.shape == y_truth.shape
    C = y_pred.shape[-1]
    if _LANES % C != 0:
        raise ValueError(
            f"lane-dense repack requires C to divide {_LANES}; got C={C}")

    p_flat = y_pred.reshape(-1)
    t_flat = y_truth.reshape(-1)
    total = p_flat.shape[0]

    pad = (-total) % _LANES
    if pad:
        # Rare path (total not a multiple of 128); zero pad does not change sums.
        p_flat = jnp.pad(p_flat, (0, pad))
        t_flat = jnp.pad(t_flat, (0, pad))

    m_rows = p_flat.shape[0] // _LANES
    p2 = p_flat.reshape(m_rows, _LANES)   # reshape of contiguous data: no copy
    t2 = t_flat.reshape(m_rows, _LANES)

    tile_m = m_rows if m_rows <= tile_m_max else tile_m_max
    n_blk = pl.cdiv(m_rows, tile_m)
    # Split blocks across TensorCores only when it divides evenly (v7x has 2 TCs;
    # on 1-TC parts this is a harmless extra output block summed in the wrapper).
    n_splits = num_splits if (n_blk >= num_splits and n_blk % num_splits == 0) else 1
    bps = n_blk // n_splits
    mask_tail = (n_blk * tile_m != m_rows)

    kernel = functools.partial(
        _dice_sums_kernel,
        m_rows=m_rows, tile_m=tile_m, bps=bps, mask_tail=mask_tail)

    out = pl.pallas_call(
        kernel,
        out_shape=jax.ShapeDtypeStruct((n_splits, 3 * _SUB, _LANES), jnp.float32),
        grid_spec=pltpu.PrefetchScalarGridSpec(
            num_scalar_prefetch=0,
            grid=(n_splits, bps),
            in_specs=[
                pl.BlockSpec((tile_m, _LANES), lambda c, i: (c * bps + i, 0)),
                pl.BlockSpec((tile_m, _LANES), lambda c, i: (c * bps + i, 0)),
            ],
            out_specs=pl.BlockSpec((None, 3 * _SUB, _LANES), lambda c, i: (c, 0, 0)),
        ),
        compiler_params=pltpu.CompilerParams(
            dimension_semantics=("parallel", "arbitrary"),
            vmem_limit_bytes=32 * 1024 * 1024,
        ),
    )(p2, t2)

    acc = jnp.sum(out, axis=0)  # (24, 128): combine per-split partials

    def fold(band):
        lane = jnp.sum(band, axis=0)                      # (128,) per-lane sums
        return jnp.sum(lane.reshape(_LANES // C, C), 0)   # channel = lane % C

    prod_c = fold(acc[0:_SUB])
    p_c = fold(acc[_SUB:2 * _SUB])
    t_c = fold(acc[2 * _SUB:3 * _SUB])
    return prod_c, p_c, t_c


def dice_loss(y_pred, y_truth, smooth=1e-6):
    """Matches DiceLoss.forward: y_pred, y_truth are (B, H, W, C) one-hot."""
    prod_c, p_c, t_c = _channel_sums(y_pred, y_truth)
    # dice1 uses channel 1 only; dice2 uses channels 2: (mirrors the PyTorch code,
    # which implicitly assumes C >= 3).
    dice1 = (2.0 * prod_c[1] + smooth) / (p_c[1] + t_c[1] + smooth)
    dice2 = (2.0 * jnp.sum(prod_c[2:]) + smooth) / (
        jnp.sum(p_c[2:]) + jnp.sum(t_c[2:]) + smooth
    )
    # TODO(synk): the .requires_grad_() calls are autograd bookkeeping with no
    # Pallas/JAX equivalent (JAX handles grads via transformations).
    return 1.0 - (dice1 + dice2) / 2.0


def _dice_loss_ref(y_pred, y_truth, smooth=1e-6):
    """Pure-JAX reference mirroring the PyTorch forward exactly."""
    C = y_pred.shape[-1]
    p = y_pred.reshape(-1, C).astype(jnp.float32)
    t = y_truth.reshape(-1, C).astype(jnp.float32)
    dice1 = (2.0 * jnp.sum(p[:, 1:2] * t[:, 1:2]) + smooth) / (
        jnp.sum(p[:, 1:2]) + jnp.sum(t[:, 1:2]) + smooth
    )
    dice2 = (2.0 * jnp.sum(p[:, 2:] * t[:, 2:]) + smooth) / (
        jnp.sum(p[:, 2:]) + jnp.sum(t[:, 2:]) + smooth
    )
    return 1.0 - (dice1 + dice2) / 2.0


if __name__ == "__main__":
    key = jax.random.PRNGKey(0)

    # Small test (single block, no masking) at the module's documented layout.
    B, H, W, C = 2, 16, 16, 4
    k1, k2, k3, k4 = jax.random.split(key, 4)
    pred_labels = jax.random.randint(k1, (B, H, W), 0, C)
    truth_labels = jax.random.randint(k2, (B, H, W), 0, C)
    y_pred = jax.nn.one_hot(pred_labels, C, dtype=jnp.float32)
    y_truth = jax.nn.one_hot(truth_labels, C, dtype=jnp.float32)

    loss = jax.block_until_ready(dice_loss(y_pred, y_truth))
    ref = jax.block_until_ready(_dice_loss_ref(y_pred, y_truth))
    assert jnp.allclose(loss, ref, rtol=1e-5, atol=1e-6), (loss, ref)

    # Larger test exercising the multi-block + 2-way split + tail-masking path.
    B2, H2, W2 = 2, 256, 288
    pred_labels2 = jax.random.randint(k3, (B2, H2, W2), 0, C)
    truth_labels2 = jax.random.randint(k4, (B2, H2, W2), 0, C)
    y_pred2 = jax.nn.one_hot(pred_labels2, C, dtype=jnp.float32)
    y_truth2 = jax.nn.one_hot(truth_labels2, C, dtype=jnp.float32)

    loss2 = jax.block_until_ready(dice_loss(y_pred2, y_truth2))
    ref2 = jax.block_until_ready(_dice_loss_ref(y_pred2, y_truth2))
    assert jnp.allclose(loss2, ref2, rtol=1e-5, atol=1e-6), (loss2, ref2)

    print("KERNEL_OK")
</pallas_src>

<mosaic_0001>
module attributes {stable_mosaic.version = 11 : i64} {
  func.func @_dice_sums_kernel(%arg0: i32, %arg1: i32, %arg2: memref<16x128xf32, #tpu.memory_space<vmem>>, %arg3: memref<16x128xf32, #tpu.memory_space<vmem>>, %arg4: memref<1x24x128xf32, #tpu.memory_space<vmem>>) attributes {dimension_semantics = [#tpu.dimension_semantics<parallel>, #tpu.dimension_semantics<arbitrary>], iteration_bounds = array<i64: 1, 1>, scalar_prefetch = 0 : i64, scratch_operands = 0 : i64, tpu.core_type = #tpu.core_type<tc>, window_params = [{transform_indices = @transform_0, window_bounds = array<i64: 16, 128>}, {transform_indices = @transform_1, window_bounds = array<i64: 16, 128>}, {transform_indices = @transform_2, window_bounds = array<i64: 1, 24, 128>}]} {
    %c0_i32 = arith.constant 0 : i32
    %0 = arith.cmpi eq, %arg1, %c0_i32 : i32
    %1 = arith.extui %0 : i1 to i32
    %c0_i32_0 = arith.constant 0 : i32
    %2 = arith.cmpi ne, %1, %c0_i32_0 : i32
    scf.if %2 {
      %cst_22 = arith.constant 0.000000e+00 : f32
      %30 = vector.broadcast %cst_22 : f32 to vector<24x128xf32>
      %c0_23 = arith.constant 0 : index
      %c0_24 = arith.constant 0 : index
      %c0_25 = arith.constant 0 : index
      %31 = vector.load %arg4[%c0_23, %c0_24, %c0_25] : memref<1x24x128xf32, #tpu.memory_space<vmem>>, vector<1x24x128xf32>
      %32 = vector.shape_cast %31 : vector<1x24x128xf32> to vector<24x128xf32>
      %33 = vector.shape_cast %30 : vector<24x128xf32> to vector<1x24x128xf32>
      tpu.vector_store %arg4[%c0_23, %c0_24, %c0_25], %33 {strides = array<i32>} : memref<1x24x128xf32, #tpu.memory_space<vmem>>, vector<1x24x128xf32>,
    } else {
    }
    %c0 = arith.constant 0 : index
    %c0_1 = arith.constant 0 : index
    %3 = vector.load %arg2[%c0, %c0_1] : memref<16x128xf32, #tpu.memory_space<vmem>>, vector<16x128xf32>
    %c0_2 = arith.constant 0 : index
    %c0_3 = arith.constant 0 : index
    %4 = vector.load %arg3[%c0_2, %c0_3] : memref<16x128xf32, #tpu.memory_space<vmem>>, vector<16x128xf32>
    %c0_4 = arith.constant 0 : index
    %c0_5 = arith.constant 0 : index
    %c0_6 = arith.constant 0 : index
    %5 = vector.load %arg4[%c0_4, %c0_5, %c0_6] : memref<1x24x128xf32, #tpu.memory_space<vmem>>, vector<1x8x128xf32>
    %6 = vector.shape_cast %5 : vector<1x8x128xf32> to vector<8x128xf32>
    %7 = arith.mulf %3, %4 : vector<16x128xf32>
    %8 = vector.shape_cast %7 : vector<16x128xf32> to vector<2x8x128xf32>
    %cst = arith.constant dense<0.000000e+00> : vector<8x128xf32>
    %9 = vector.multi_reduction <add>, %8, %cst [0] : vector<2x8x128xf32> to vector<8x128xf32>
    %10 = arith.addf %6, %9 : vector<8x128xf32>
    %c0_7 = arith.constant 0 : index
    %c0_8 = arith.constant 0 : index
    %c0_9 = arith.constant 0 : index
    %11 = vector.load %arg4[%c0_7, %c0_8, %c0_9] : memref<1x24x128xf32, #tpu.memory_space<vmem>>, vector<1x8x128xf32>
    %12 = vector.shape_cast %11 : vector<1x8x128xf32> to vector<8x128xf32>
    %13 = vector.shape_cast %10 : vector<8x128xf32> to vector<1x8x128xf32>
    tpu.vector_store %arg4[%c0_7, %c0_8, %c0_9], %13 {strides = array<i32>} : memref<1x24x128xf32, #tpu.memory_space<vmem>>, vector<1x8x128xf32>,
    %c0_10 = arith.constant 0 : index
    %c8 = arith.constant 8 : index
    %c0_11 = arith.constant 0 : index
    %14 = vector.load %arg4[%c0_10, %c8, %c0_11] : memref<1x24x128xf32, #tpu.memory_space<vmem>>, vector<1x8x128xf32>
    %15 = vector.shape_cast %14 : vector<1x8x128xf32> to vector<8x128xf32>
    %16 = vector.shape_cast %3 : vector<16x128xf32> to vector<2x8x128xf32>
    %cst_12 = arith.constant dense<0.000000e+00> : vector<8x128xf32>
    %17 = vector.multi_reduction <add>, %16, %cst_12 [0] : vector<2x8x128xf32> to vector<8x128xf32>
    %18 = arith.addf %15, %17 : vector<8x128xf32>
    %c0_13 = arith.constant 0 : index
    %c8_14 = arith.constant 8 : index
    %c0_15 = arith.constant 0 : index
    %19 = vector.load %arg4[%c0_13, %c8_14, %c0_15] : memref<1x24x128xf32, #tpu.memory_space<vmem>>, vector<1x8x128xf32>
    %20 = vector.shape_cast %19 : vector<1x8x128xf32> to vector<8x128xf32>
    %21 = vector.shape_cast %18 : vector<8x128xf32> to vector<1x8x128xf32>
    tpu.vector_store %arg4[%c0_13, %c8_14, %c0_15], %21 {strides = array<i32>} : memref<1x24x128xf32, #tpu.memory_space<vmem>>, vector<1x8x128xf32>,
    %c0_16 = arith.constant 0 : index
    %c16 = arith.constant 16 : index
    %c0_17 = arith.constant 0 : index
    %22 = vector.load %arg4[%c0_16, %c16, %c0_17] : memref<1x24x128xf32, #tpu.memory_space<vmem>>, vector<1x8x128xf32>
    %23 = vector.shape_cast %22 : vector<1x8x128xf32> to vector<8x128xf32>
    %24 = vector.shape_cast %4 : vector<16x128xf32> to vector<2x8x128xf32>
    %cst_18 = arith.constant dense<0.000000e+00> : vector<8x128xf32>
    %25 = vector.multi_reduction <add>, %24, %cst_18 [0] : vector<2x8x128xf32> to vector<8x128xf32>
    %26 = arith.addf %23, %25 : vector<8x128xf32>
    %c0_19 = arith.constant 0 : index
    %c16_20 = arith.constant 16 : index
    %c0_21 = arith.constant 0 : index
    %27 = vector.load %arg4[%c0_19, %c16_20, %c0_21] : memref<1x24x128xf32, #tpu.memory_space<vmem>>, vector<1x8x128xf32>
    %28 = vector.shape_cast %27 : vector<1x8x128xf32> to vector<8x128xf32>
    %29 = vector.shape_cast %26 : vector<8x128xf32> to vector<1x8x128xf32>
    tpu.vector_store %arg4[%c0_19, %c16_20, %c0_21], %29 {strides = array<i32>} : memref<1x24x128xf32, #tpu.memory_space<vmem>>, vector<1x8x128xf32>,
    return
  }
  func.func @transform_0(%arg0: i32, %arg1: i32) -> (i32, i32) {
    %c1_i32 = arith.constant 1 : i32
    %0 = arith.muli %arg0, %c1_i32 : i32
    %1 = arith.addi %0, %arg1 : i32
    %c0_i32 = arith.constant 0 : i32
    %c0_i32_0 = arith.constant 0 : i32
    return %1, %c0_i32 : i32, i32
  }
  func.func @transform_1(%arg0: i32, %arg1: i32) -> (i32, i32) {
    %c1_i32 = arith.constant 1 : i32
    %0 = arith.muli %arg0, %c1_i32 : i32
    %1 = arith.addi %0, %arg1 : i32
    %c0_i32 = arith.constant 0 : i32
    %c0_i32_0 = arith.constant 0 : i32
    return %1, %c0_i32 : i32, i32
  }
  func.func @transform_2(%arg0: i32, %arg1: i32) -> (i32, i32, i32) {
    %c0_i32 = arith.constant 0 : i32
    %c0_i32_0 = arith.constant 0 : i32
    %c0_i32_1 = arith.constant 0 : i32
    return %arg0, %c0_i32, %c0_i32_0 : i32, i32, i32
  }
}

</mosaic_0001>

<llo_original>
// kernel: tpu_custom_call.1
$region0: #{tpu_custom_call.1}
  #allocation0 [shape = 'u32[]', space=smem, size = 0x4, offset = 0x4, fixed_abs, tag = 'smem constant byte address 0x4 - core index']
  #allocation1 [shape = 'u32[144,128]{1,0:T(1,128)}', space=vmem, size = 0x12000, scoped, tag = 'internal scratch']
  %s0 = inlined_call_operand.hbm [shape: f32[16,128], index: 0, kind: input, shape index: {}]
  %s1 = inlined_call_operand.hbm [shape: f32[16,128], index: 1, kind: input, shape index: {}]
  %s2 = inlined_call_operand.hbm [shape: f32[1,24,128], index: 2, kind: output, shape index: {}]
  %s3 = sld [smem:[#allocation0]]
  $region30: #{tpu_custom_call.1} parent=0
    _
  %s5 = ssub.s32 1, %s3
  %s6 = scalar_select 0, %s5, %s3
  $region1: #{tpu_custom_call.1} parent=0
    #allocation2 [shape = 'u8[8192]{0}', space=vmem, size = 0x2000, scoped, tag = 'input window, operand 0, single buffered']
    #allocation3 [shape = 's32[1]{0}', space=sflag, size = 0x4, scoped, tag = 'scoped memory for tpu_custom_call.1']
    #allocation4 [shape = 's32[1]{0}', space=sflag, size = 0x4, scoped, tag = 'scoped memory for tpu_custom_call.1']
    #allocation5 [shape = 'u8[8192]{0}', space=vmem, size = 0x2000, scoped, tag = 'input window, operand 1, single buffered']
    #allocation6 [shape = 's32[1]{0}', space=sflag, size = 0x4, scoped, tag = 'scoped memory for tpu_custom_call.1']
    #allocation7 [shape = 'u8[12288]{0}', space=vmem, size = 0x3000, scoped, tag = 'output window, operand 0, single buffered']
    %7 = vsyncpa [#allocation3], 0
    %8 = vsyncpa [#allocation6], 0
    %9 = vsyncpa [#allocation4], 0
    // Predicated region
    $region2: #{tpu_custom_call.1} parent=1 // pred_check
      _
    $region3: #{tpu_custom_call.1} parent=1 // pred_check_branch
      %11 = sbr.rel (0) target = $region5
    $region4: #{tpu_custom_call.1} parent=1 // pred_region
      %s12 = sadd.s32 0, 0
      %s13 = smul.u32 2, %s12
      %s15 = ssub.s32 256, 256
      %16 = vsyncadd [#allocation3], %s15
      %s17 = smul.addr %s13, 128
      %s18 = scalar_lea.hbm %s0, %s17
      %s19 = sshll.u32 [#allocation2], 4
      %s20 = int_to_ptr.vmem [resolvable:$true] %s19
      %25 = dma.hbm_to_vmem [thread:$0]  %s18, 256, %s20, [#allocation3], 128, 128, 8
    $region5: #{tpu_custom_call.1} parent=1 // pred_fallthru
      _
    // Predicated region
    $region6: #{tpu_custom_call.1} parent=1 // pred_check
      _
    $region7: #{tpu_custom_call.1} parent=1 // pred_check_branch
      %27 = sbr.rel (0) target = $region9
    $region8: #{tpu_custom_call.1} parent=1 // pred_region
      %s28 = sadd.s32 0, 0
      %s29 = smul.u32 2, %s28
      %s31 = ssub.s32 256, 256
      %32 = vsyncadd [#allocation6], %s31
      %s33 = smul.addr %s29, 128
      %s34 = scalar_lea.hbm %s1, %s33
      %s35 = sshll.u32 [#allocation5], 4
      %s36 = int_to_ptr.vmem [resolvable:$true] %s35
      %41 = dma.hbm_to_vmem [thread:$0]  %s34, 256, %s36, [#allocation6], 128, 128, 8
    $region9: #{tpu_custom_call.1} parent=1 // pred_fallthru
      _
    // Predicated region
    $region10: #{tpu_custom_call.1} parent=1 // pred_check
      _
    $region11: #{tpu_custom_call.1} parent=1 // pred_check_branch
      %43 = sbr.rel (0) target = $region13
    $region12: #{tpu_custom_call.1} parent=1 // pred_region
      %44 = dma.done [#allocation3], 256
    $region13: #{tpu_custom_call.1} parent=1 // pred_fallthru
      _
    // Predicated region
    $region14: #{tpu_custom_call.1} parent=1 // pred_check
      _
    $region15: #{tpu_custom_call.1} parent=1 // pred_check_branch
      %46 = sbr.rel (0) target = $region17
    $region16: #{tpu_custom_call.1} parent=1 // pred_region
      %47 = dma.done [#allocation6], 256
    $region17: #{tpu_custom_call.1} parent=1 // pred_fallthru
      _
    %s48 = sadd.s32 0, 0
    %s49 = smul.u32 2, %s48
    %s50 = sadd.s32 0, 0
    %s51 = smul.u32 2, %s50
    %p52 = scmp.eq.s32.totalorder 0, 0
    // Predicated region
    $region18: #{tpu_custom_call.1} parent=1 // pred_check
      %p53 = pneg %p52
    $region19: #{tpu_custom_call.1} parent=1 // pred_check_branch
      %55 = sbr.rel (%p53) target = $region21
    $region20: #{tpu_custom_call.1} parent=1 // pred_region
      %56 = vst [vmem:[#allocation7] sm:$0xff] 0.0
      %57 = vst [vmem:[#allocation7 + $0x8] sm:$0xff] 0.0
      %58 = vst [vmem:[#allocation7 + $0x10] sm:$0xff] 0.0
    $region21: #{tpu_custom_call.1} parent=1 // pred_fallthru
      _
    %v59 = vld [vmem:[#allocation2] sm:$0xff]
    %v60 = vld [vmem:[#allocation2 + $0x8] sm:$0xff]
    %v61 = vld [vmem:[#allocation5] sm:$0xff]
    %v62 = vld [vmem:[#allocation5 + $0x8] sm:$0xff]
    %v63 = vld [vmem:[#allocation7] sm:$0xff]
    %v64 = vmul.f32 %v59, %v61
    %v65 = vmul.f32 %v60, %v62
    %v66 = vadd.f32 %v64, %v65
    %v67 = vadd.f32 %v63, %v66
    %68 = vst [vmem:[#allocation7] sm:$0xff] %v67
    %v69 = vld [vmem:[#allocation7 + $0x8] sm:$0xff]
    %v70 = vadd.f32 %v59, %v60
    %v71 = vadd.f32 %v69, %v70
    %72 = vst [vmem:[#allocation7 + $0x8] sm:$0xff] %v71
    %v73 = vld [vmem:[#allocation7 + $0x10] sm:$0xff]
    %v74 = vadd.f32 %v61, %v62
    %v75 = vadd.f32 %v73, %v74
    %76 = vst [vmem:[#allocation7 + $0x10] sm:$0xff] %v75
    // Predicated region
    $region22: #{tpu_custom_call.1} parent=1 // pred_check
      _
    $region23: #{tpu_custom_call.1} parent=1 // pred_check_branch
      %78 = sbr.rel (0) target = $region25
    $region24: #{tpu_custom_call.1} parent=1 // pred_region
      %s80 = ssub.s32 384, 384
      %81 = vsyncadd [#allocation4], %s80
      %s82 = sshll.u32 [#allocation7], 4
      %s83 = int_to_ptr.vmem [resolvable:$true] %s82
      %88 = dma.vmem_to_hbm [thread:$0]  %s83, 384, %s2, [#allocation4], 128, 128, 8
    $region25: #{tpu_custom_call.1} parent=1 // pred_fallthru
      _
    // Predicated region
    $region26: #{tpu_custom_call.1} parent=1 // pred_check
      _
    $region27: #{tpu_custom_call.1} parent=1 // pred_check_branch
      %90 = sbr.rel (0) target = $region29
    $region28: #{tpu_custom_call.1} parent=1 // pred_region
      %91 = dma.done [#allocation4], 384
    $region29: #{tpu_custom_call.1} parent=1 // pred_fallthru
      _
    %92 = vsyncpa [#allocation3], 1
    %93 = vsyncpa [#allocation6], 1
    %94 = vsyncpa [#allocation4], 1

</llo_original>
